<compile_context>
chip_gen: v7x
topology: tpu7x:2x2x1
jax: 0.10.0
libtpu: 0.0.40
codegen_flags: <defaults>
</compile_context>

<pallas_src>
import functools

import jax
import jax.numpy as jnp
from jax.experimental import pallas as pl
from jax.experimental.pallas import tpu as pltpu


def _round_up(x, m):
    return (x + m - 1) // m * m


def _tcn_kernel(x_ref, k_ref, shift_ref, o_ref, *, apply_relu):
    # x_ref:     (1, TM, Kp)   row tile of one branch (matmul dtype, e.g. bf16)
    # k_ref:     (1, Kp, Np)   fused temporal-window x channel-mix x BN-scale operator
    # shift_ref: (1, 1,  Np)   fused conv-bias + BN shift (f32)
    # o_ref:     (1, TM, Np)   f32 output tile (lane-dense, Np % 128 == 0)
    y = jnp.dot(x_ref[0], k_ref[0], preferred_element_type=jnp.float32)
    y = y + shift_ref[0]
    if apply_relu:                       # sigma = ReLU (parametric path); Identity otherwise
        y = jnp.maximum(y, 0.0)
    o_ref[0] = y.astype(o_ref.dtype)


def _fused_operator(weight, scale, T):
    """Kfused[(t, ci), (to, co)] = sum_k [t == to + k] * weight[co, ci, k] * scale[co]."""
    Cout, Cin, Kw = weight.shape
    Tout = T - Kw + 1
    t = jnp.arange(T)
    to = jnp.arange(Tout)
    k = jnp.arange(Kw)
    sel = (t[None, None, :] == (to[None, :, None] + k[:, None, None])).astype(jnp.float32)
    w = weight.astype(jnp.float32) * scale.astype(jnp.float32)[:, None, None]   # (Cout, Cin, Kw)
    kf = jnp.einsum('kot,yik->tioy', sel, w)                                     # (T, Cin, Tout, Cout)
    return kf.reshape(T * Cin, Tout * Cout)


def node_edge_tcn_forward(x, z, bn_node, bn_edge, *,
                          kernel_size=7,
                          use_non_parametric=True,
                          conv_node=None, conv_edge=None,
                          eps=1e-5,
                          matmul_dtype=jnp.bfloat16,
                          row_tile=1024):
    """x, z: (N, C, V, T) NCHW like the PyTorch module.  bn_*: (gamma, beta, mean, var).

    Returns (out_node, out_edge), each (N, Cout, V, T - kernel_size + 1)."""
    N, Cin, V, T = x.shape
    assert z.shape == x.shape
    Kw = kernel_size
    Tout = T - Kw + 1

    if use_non_parametric:
        # AvgPool2d((1, Kw)) == temporal conv with identity channel mixing / Kw, no bias.
        w = jnp.eye(Cin, dtype=jnp.float32)[:, :, None] * (jnp.ones((Kw,), jnp.float32) / Kw)
        weights = (w, w)
        biases = (jnp.zeros((Cin,), jnp.float32), jnp.zeros((Cin,), jnp.float32))
        apply_relu = False                                   # sigma = Identity
    else:
        wn, bias_n = conv_node                               # weight (Cout, Cin, 1, Kw), bias (Cout,)
        we, bias_e = conv_edge
        weights = (wn.reshape(wn.shape[0], wn.shape[1], Kw),
                   we.reshape(we.shape[0], we.shape[1], Kw))
        biases = (bias_n, bias_e)
        apply_relu = True                                    # sigma = ReLU

    Cout = weights[0].shape[0]

    k_list, shift_list = [], []
    for (gamma, beta, mean, var), w_b, bias_b in zip((bn_node, bn_edge), weights, biases):
        scale = gamma.astype(jnp.float32) / jnp.sqrt(var.astype(jnp.float32) + eps)
        shift = beta.astype(jnp.float32) + (bias_b.astype(jnp.float32) - mean.astype(jnp.float32)) * scale
        k_list.append(_fused_operator(w_b, scale, T))        # BN scale folded into columns
        shift_list.append(jnp.tile(shift, Tout))             # column index = to*Cout + co

    Kdim, Nout, M = T * Cin, Tout * Cout, N * V

    # Lane-dense / sublane-aligned padding.
    Kp = _round_up(Kdim, 128)
    Np = _round_up(Nout, 128)
    TM = min(row_tile, _round_up(M, 8))
    Mp = _round_up(M, TM)

    def rows(a):
        r = jnp.transpose(a, (0, 2, 3, 1)).reshape(M, Kdim)  # (N*V, T*Cin), feature = t*Cin + ci
        return jnp.pad(r, ((0, Mp - M), (0, Kp - Kdim)))

    X = jnp.stack([rows(x), rows(z)]).astype(matmul_dtype)                                  # (2, Mp, Kp)
    Kfused = jnp.stack([jnp.pad(k, ((0, Kp - Kdim), (0, Np - Nout))) for k in k_list]
                       ).astype(matmul_dtype)                                               # (2, Kp, Np)
    shift = jnp.stack([jnp.pad(s, (0, Np - Nout)) for s in shift_list]
                      ).reshape(2, 1, Np).astype(jnp.float32)                               # (2, 1, Np)

    n_row_tiles = Mp // TM
    flops = 2 * 2 * Mp * Kp * Np
    bytes_accessed = (X.size * X.dtype.itemsize + Kfused.size * Kfused.dtype.itemsize
                      + shift.size * 4 + 2 * Mp * Np * 4)

    out = pl.pallas_call(
        functools.partial(_tcn_kernel, apply_relu=apply_relu),
        out_shape=jax.ShapeDtypeStruct((2, Mp, Np), jnp.float32),
        grid_spec=pltpu.PrefetchScalarGridSpec(
            num_scalar_prefetch=0,
            grid=(2, n_row_tiles),                      # (branch, row tiles); rows vary fastest
            in_specs=[
                pl.BlockSpec((1, TM, Kp), lambda b, i: (b, i, 0)),
                pl.BlockSpec((1, Kp, Np), lambda b, i: (b, 0, 0)),   # K resident across row tiles
                pl.BlockSpec((1, 1, Np), lambda b, i: (b, 0, 0)),
            ],
            out_specs=pl.BlockSpec((1, TM, Np), lambda b, i: (b, i, 0)),
        ),
        compiler_params=pltpu.CompilerParams(
            dimension_semantics=("parallel", "parallel")),
        cost_estimate=pl.CostEstimate(flops=flops, transcendentals=0,
                                      bytes_accessed=bytes_accessed),
    )(X, Kfused, shift)

    out = out[:, :M, :Nout].reshape(2, N, V, Tout, Cout)
    out = jnp.transpose(out, (0, 1, 4, 2, 3))               # (2, N, Cout, V, Tout)
    return out[0], out[1]


def node_edge_tcn_reference(x, z, bn_node, bn_edge, *, kernel_size=7, eps=1e-5):
    """Pure-JAX reference mirroring the PyTorch forward (default path, eval-mode BN)."""
    Kw = kernel_size

    def branch(inp, bn):
        gamma, beta, mean, var = bn
        Tout = inp.shape[-1] - Kw + 1
        pooled = jnp.mean(jnp.stack([inp[..., k:k + Tout] for k in range(Kw)], 0), 0)

        def b(p):
            return p[None, :, None, None]

        out = (pooled - b(mean)) / jnp.sqrt(b(var) + eps) * b(gamma) + b(beta)
        return out                                            # sigma = Identity, dropout(p=0) = id

    return branch(x, bn_node), branch(z, bn_edge)


if __name__ == "__main__":
    N, C, V, T = 2, 32, 16, 16          # batch, channels (in == out for the avg-pool path), joints, frames
    Kw = 7

    key = jax.random.PRNGKey(0)
    kx, kz, kg, kb, km, kv = jax.random.split(key, 6)

    x = jax.random.normal(kx, (N, C, V, T), dtype=jnp.float32)
    z = jax.random.normal(kz, (N, C, V, T), dtype=jnp.float32)

    # eval-mode BatchNorm2d params / running stats (non-trivial for the node branch to
    # exercise the scale/shift fold; PyTorch defaults for the edge branch)
    bn_node = (jax.random.uniform(kg, (C,), minval=0.5, maxval=1.5),
               0.1 * jax.random.normal(kb, (C,)),
               0.1 * jax.random.normal(km, (C,)),
               jax.random.uniform(kv, (C,), minval=0.5, maxval=1.5))
    bn_edge = (jnp.ones((C,), jnp.float32), jnp.zeros((C,), jnp.float32),
               jnp.zeros((C,), jnp.float32), jnp.ones((C,), jnp.float32))

    out_node, out_edge = node_edge_tcn_forward(x, z, bn_node, bn_edge, kernel_size=Kw)
    out_node, out_edge = jax.block_until_ready((out_node, out_edge))

    ref_node, ref_edge = node_edge_tcn_reference(x, z, bn_node, bn_edge, kernel_size=Kw)
    assert out_node.shape == (N, C, V, T - Kw + 1)
    assert out_edge.shape == (N, C, V, T - Kw + 1)
    # bf16 matmul operands (f32 accumulation) vs f32 reference -> loosened tolerance
    assert jnp.allclose(out_node, ref_node, atol=2e-2, rtol=2e-2)
    assert jnp.allclose(out_edge, ref_edge, atol=2e-2, rtol=2e-2)

    print("KERNEL_OK")
</pallas_src>

<mosaic_0001>
module attributes {stable_mosaic.version = 11 : i64} {
  func.func @_tcn_kernel(%arg0: i32, %arg1: i32, %arg2: memref<1x32x512xbf16, #tpu.memory_space<vmem>>, %arg3: memref<1x512x384xbf16, #tpu.memory_space<vmem>>, %arg4: memref<1x1x384xf32, #tpu.memory_space<vmem>>, %arg5: memref<1x32x384xf32, #tpu.memory_space<vmem>>) attributes {dimension_semantics = [#tpu.dimension_semantics<parallel>, #tpu.dimension_semantics<parallel>], iteration_bounds = array<i64: 2, 1>, scalar_prefetch = 0 : i64, scratch_operands = 0 : i64, tpu.core_type = #tpu.core_type<tc>, window_params = [{transform_indices = @transform_0, window_bounds = array<i64: 1, 32, 512>}, {transform_indices = @transform_1, window_bounds = array<i64: 1, 512, 384>}, {transform_indices = @transform_2, window_bounds = array<i64: 1, 1, 384>}, {transform_indices = @transform_3, window_bounds = array<i64: 1, 32, 384>}]} {
    %c0 = arith.constant 0 : index
    %c0_0 = arith.constant 0 : index
    %c0_1 = arith.constant 0 : index
    %0 = vector.load %arg2[%c0, %c0_0, %c0_1] : memref<1x32x512xbf16, #tpu.memory_space<vmem>>, vector<1x32x512xbf16>
    %1 = vector.shape_cast %0 : vector<1x32x512xbf16> to vector<32x512xbf16>
    %c0_2 = arith.constant 0 : index
    %c0_3 = arith.constant 0 : index
    %c0_4 = arith.constant 0 : index
    %2 = vector.load %arg3[%c0_2, %c0_3, %c0_4] : memref<1x512x384xbf16, #tpu.memory_space<vmem>>, vector<1x512x384xbf16>
    %3 = vector.shape_cast %2 : vector<1x512x384xbf16> to vector<512x384xbf16>
    %cst = arith.constant dense<0.000000e+00> : vector<32x384xf32>
    %4 = tpu.matmul %1, %3, %cst {dimension_numbers = #tpu.dot_dimension_numbers<[1], [0], [0], [1], [0, 0, 1, 1], [], []>} : vector<32x512xbf16>, vector<512x384xbf16>, vector<32x384xf32> -> vector<32x384xf32>
    %c0_5 = arith.constant 0 : index
    %c0_6 = arith.constant 0 : index
    %c0_7 = arith.constant 0 : index
    %5 = vector.load %arg4[%c0_5, %c0_6, %c0_7] : memref<1x1x384xf32, #tpu.memory_space<vmem>>, vector<1x1x384xf32>
    %6 = vector.shape_cast %5 : vector<1x1x384xf32> to vector<1x384xf32>
    %7 = vector.broadcast %6 : vector<1x384xf32> to vector<32x384xf32>
    %8 = arith.addf %4, %7 : vector<32x384xf32>
    %c0_8 = arith.constant 0 : index
    %c0_9 = arith.constant 0 : index
    %c0_10 = arith.constant 0 : index
    %9 = vector.load %arg5[%c0_8, %c0_9, %c0_10] : memref<1x32x384xf32, #tpu.memory_space<vmem>>, vector<1x32x384xf32>
    %10 = vector.shape_cast %9 : vector<1x32x384xf32> to vector<32x384xf32>
    %11 = vector.shape_cast %8 : vector<32x384xf32> to vector<1x32x384xf32>
    tpu.vector_store %arg5[%c0_8, %c0_9, %c0_10], %11 {strides = array<i32>} : memref<1x32x384xf32, #tpu.memory_space<vmem>>, vector<1x32x384xf32>,
    return
  }
  func.func @transform_0(%arg0: i32, %arg1: i32) -> (i32, i32, i32) {
    %c0_i32 = arith.constant 0 : i32
    %c0_i32_0 = arith.constant 0 : i32
    return %arg0, %arg1, %c0_i32 : i32, i32, i32
  }
  func.func @transform_1(%arg0: i32, %arg1: i32) -> (i32, i32, i32) {
    %c0_i32 = arith.constant 0 : i32
    %c0_i32_0 = arith.constant 0 : i32
    %c0_i32_1 = arith.constant 0 : i32
    return %arg0, %c0_i32, %c0_i32_0 : i32, i32, i32
  }
  func.func @transform_2(%arg0: i32, %arg1: i32) -> (i32, i32, i32) {
    %c0_i32 = arith.constant 0 : i32
    %c0_i32_0 = arith.constant 0 : i32
    %c0_i32_1 = arith.constant 0 : i32
    return %arg0, %c0_i32, %c0_i32_0 : i32, i32, i32
  }
  func.func @transform_3(%arg0: i32, %arg1: i32) -> (i32, i32, i32) {
    %c0_i32 = arith.constant 0 : i32
    %c0_i32_0 = arith.constant 0 : i32
    return %arg0, %arg1, %c0_i32 : i32, i32, i32
  }
}

</mosaic_0001>

<llo_original>
// kernel: tpu_custom_call.1
$region0: #{tpu_custom_call.1}
  #allocation0 [shape = 'u32[]', space=smem, size = 0x4, offset = 0x4, fixed_abs, tag = 'smem constant byte address 0x4 - core index']
  #allocation1 [shape = 'u32[144,128]{1,0:T(1,128)}', space=vmem, size = 0x12000, scoped, tag = 'internal scratch']
  %s0 = inlined_call_operand.hbm [shape: bf16[2,32,512], index: 0, kind: input, shape index: {}]
  %s1 = inlined_call_operand.hbm [shape: bf16[2,512,384], index: 1, kind: input, shape index: {}]
  %s2 = inlined_call_operand.vmem [shape: f32[2,1,384], index: 2, kind: input, shape index: {}]
  %s3 = inlined_call_operand.hbm [shape: f32[2,32,384], index: 3, kind: output, shape index: {}]
  %s4 = sld [smem:[#allocation0]]
  $region53: #{tpu_custom_call.1} parent=0
    _
  %s6 = ssub.s32 1, %s4
  %s7 = scalar_select 0, %s6, %s4
  $region1: #{tpu_custom_call.1} parent=0
    #allocation2 [shape = 'u8[65536]{0}', space=vmem, size = 0x10000, scoped, tag = 'input window, operand 0']
    #allocation3 [shape = 's32[2]{0}', space=sflag, size = 0x8, scoped, tag = 'scoped memory for tpu_custom_call.1']
    #allocation4 [shape = 's32[2]{0}', space=sflag, size = 0x8, scoped, tag = 'scoped memory for tpu_custom_call.1']
    #allocation5 [shape = 'u8[786432]{0}', space=vmem, size = 0xc0000, scoped, tag = 'input window, operand 1']
    #allocation6 [shape = 's32[2]{0}', space=sflag, size = 0x8, scoped, tag = 'scoped memory for tpu_custom_call.1']
    #allocation7 [shape = 'u8[98304]{0}', space=vmem, size = 0x18000, scoped, tag = 'output window, operand 0']
    %8 = vsyncpa [#allocation3], 0
    %s9 = scalar_lea.sflag [#allocation3], 1
    %10 = vsyncpa %s9, 0
    %11 = vsyncpa [#allocation6], 0
    %s12 = scalar_lea.sflag [#allocation6], 1
    %13 = vsyncpa %s12, 0
    %14 = vsyncpa [#allocation4], 0
    %s15 = scalar_lea.sflag [#allocation4], 1
    %16 = vsyncpa %s15, 0
    loop: start=0, step=1, limit=4
    $region2: #{tpu_custom_call.1} parent=1 // loop_pre_header
      _
    $region3: #{tpu_custom_call.1} parent=1 // loop_header
      %s18 = sphi 0, %s22
      %p19 = scmp.ge.s32.totalorder %s18, 4
      %s25 = sphi 0, %s37
      %s26 = sphi 0, %s33
      %s27 = sphi 0, %s25
      %s28 = sphi 0, %s26
      %s29 = sphi 0, %s27
      %s30 = sphi 0, %s28
      %s42 = sphi 0, %s44
      %s45 = sphi 0, %s42
      %s46 = sphi 0, %s45
      %s62 = sphi 0, %s46
      %s68 = sphi 0, %s70
      %s71 = sphi 0, %s68
      %s72 = sphi 0, %s71
      %s88 = sphi 0, %s72
      %s94 = sphi 0, %s96
      %s97 = sphi 0, %s94
      %s98 = sphi 0, %s97
      %s114 = sphi 0, %s98
      %s122 = sphi 0, %s124
      %s125 = sphi 0, %s122
      %s126 = sphi 0, %s125
      %s142 = sphi 0, %s126
    $region4: #{tpu_custom_call.1} parent=1 // loop_header_branch
      %21 = sbr.rel (%p19) target = $region8
    $region5: #{tpu_custom_call.1} parent=1 // loop_body
      %s23 = ssub.s32 %s18, 1
      %s24 = ssub.s32 %s18, 2
      %s31 = sadd.s32 1, %s26
      %p32 = scmp.ge.s32.totalorder %s31, 1
      %s33 = scalar_select %p32, 0, %s31
      %s34 = sadd.s32 1, %s25
      %s35 = scalar_select %p32, %s34, %s25
      %p36 = scmp.ge.s32.totalorder %s35, 2
      %s37 = scalar_select %p36, 0, %s35
      %s38 = ssub.s32 %s25, %s37
      %s39 = ssub.s32 %s26, %s33
      %s40 = sor.u32 %s38, %s39
      %p41 = scmp.eq.s32.totalorder %s40, 0
      %s43 = sadd.s32 %s42, 1
      %s44 = scalar_select %p41, %s42, %s43
      %p47 = pneg %p41
      %p48 = scmp.eq.s32.totalorder %s18, 1
      %p49 = por %p47, %p48
      %p50 = scmp.ne.s32.totalorder %s42, %s45
      %p51 = scmp.eq.s32.totalorder %s18, 0
      %p52 = por %p50, %p51
      %p53 = scmp.ne.s32.totalorder %s42, %s45
      %p54 = scmp.eq.s32.totalorder %s23, 1
      %p55 = por %p53, %p54
      %p56 = scmp.ne.s32.totalorder %s45, %s46
      %p57 = scmp.eq.s32.totalorder %s23, 0
      %p58 = por %p56, %p57
      %p59 = scmp.ne.s32.totalorder %s45, %s46
      %p60 = scmp.eq.s32.totalorder %s24, 1
      %p61 = por %p59, %p60
      %p63 = scmp.ne.s32.totalorder %s46, %s62
      %p64 = scmp.eq.s32.totalorder %s24, 0
      %p65 = por %p63, %p64
      %s66 = ssub.s32 %s25, %s37
      %p67 = scmp.eq.s32.totalorder %s66, 0
      %s69 = sadd.s32 %s68, 1
      %s70 = scalar_select %p67, %s68, %s69
      %p73 = pneg %p67
      %p74 = scmp.eq.s32.totalorder %s18, 1
      %p75 = por %p73, %p74
      %p76 = scmp.ne.s32.totalorder %s68, %s71
      %p77 = scmp.eq.s32.totalorder %s18, 0
      %p78 = por %p76, %p77
      %p79 = scmp.ne.s32.totalorder %s68, %s71
      %p80 = scmp.eq.s32.totalorder %s23, 1
      %p81 = por %p79, %p80
      %p82 = scmp.ne.s32.totalorder %s71, %s72
      %p83 = scmp.eq.s32.totalorder %s23, 0
      %p84 = por %p82, %p83
      %p85 = scmp.ne.s32.totalorder %s71, %s72
      %p86 = scmp.eq.s32.totalorder %s24, 1
      %p87 = por %p85, %p86
      %p89 = scmp.ne.s32.totalorder %s72, %s88
      %p90 = scmp.eq.s32.totalorder %s24, 0
      %p91 = por %p89, %p90
      %s92 = ssub.s32 %s25, %s37
      %p93 = scmp.eq.s32.totalorder %s92, 0
      %s95 = sadd.s32 %s94, 1
      %s96 = scalar_select %p93, %s94, %s95
      %p99 = pneg %p93
      %p100 = scmp.eq.s32.totalorder %s18, 1
      %p101 = por %p99, %p100
      %p102 = scmp.ne.s32.totalorder %s94, %s97
      %p103 = scmp.eq.s32.totalorder %s18, 0
      %p104 = por %p102, %p103
      %p105 = scmp.ne.s32.totalorder %s94, %s97
      %p106 = scmp.eq.s32.totalorder %s23, 1
      %p107 = por %p105, %p106
      %p108 = scmp.ne.s32.totalorder %s97, %s98
      %p109 = scmp.eq.s32.totalorder %s23, 0
      %p110 = por %p108, %p109
      %p111 = scmp.ne.s32.totalorder %s97, %s98
      %p112 = scmp.eq.s32.totalorder %s24, 1
      %p113 = por %p111, %p112
      %p115 = scmp.ne.s32.totalorder %s98, %s114
      %p116 = scmp.eq.s32.totalorder %s24, 0
      %p117 = por %p115, %p116
      %s118 = ssub.s32 %s25, %s37
      %s119 = ssub.s32 %s26, %s33
      %s120 = sor.u32 %s118, %s119
      %p121 = scmp.eq.s32.totalorder %s120, 0
      %s123 = sadd.s32 %s122, 1
      %s124 = scalar_select %p121, %s122, %s123
      %p127 = pneg %p121
      %p128 = scmp.eq.s32.totalorder %s18, 1
      %p129 = por %p127, %p128
      %p130 = scmp.ne.s32.totalorder %s122, %s125
      %p131 = scmp.eq.s32.totalorder %s18, 0
      %p132 = por %p130, %p131
      %p133 = scmp.ne.s32.totalorder %s122, %s125
      %p134 = scmp.eq.s32.totalorder %s23, 1
      %p135 = por %p133, %p134
      %p136 = scmp.ne.s32.totalorder %s125, %s126
      %p137 = scmp.eq.s32.totalorder %s23, 0
      %p138 = por %p136, %p137
      %p139 = scmp.ne.s32.totalorder %s125, %s126
      %p140 = scmp.eq.s32.totalorder %s24, 1
      %p141 = por %p139, %p140
      %p143 = scmp.ne.s32.totalorder %s126, %s142
      %p144 = scmp.eq.s32.totalorder %s24, 0
      %p145 = por %p143, %p144
      %p146 = scmp.le.s32.totalorder 1, %s18
      %p147 = scmp.lt.s32.totalorder %s18, 3
      %p148 = pnand %p146, %p147
      %p149 = pneg %p148
      // Predicated region
      $region9: #{tpu_custom_call.1} parent=5 // pred_check
        _
      $region10: #{tpu_custom_call.1} parent=5 // pred_check_branch
        %151 = sbr.rel (%p148) target = $region12
      $region11: #{tpu_custom_call.1} parent=5 // pred_region
        %s152 = ssub.s32 %s18, 1
      $region12: #{tpu_custom_call.1} parent=5 // pred_fallthru
        _
      %p153 = scmp.lt.s32.totalorder %s18, 2
      // Predicated region
      $region13: #{tpu_custom_call.1} parent=5 // pred_check
        %p154 = pneg %p153
      $region14: #{tpu_custom_call.1} parent=5 // pred_check_branch
        %156 = sbr.rel (%p154) target = $region16
      $region15: #{tpu_custom_call.1} parent=5 // pred_region
        // Predicated region
        $region17: #{tpu_custom_call.1} parent=15 // pred_check
          %p157 = pneg %p52
        $region18: #{tpu_custom_call.1} parent=15 // pred_check_branch
          %159 = sbr.rel (%p157) target = $region20
        $region19: #{tpu_custom_call.1} parent=15 // pred_region
          %s160 = sand.u32 %s42, 1
          %s161 = scalar_lea.sflag [#allocation3], %s160
          %s162 = sand.u32 %s42, 1
          %s163 = smul.addr %s162, 64
          %s164 = scalar_lea.vmem [#allocation2], %s163
          %s165 = smul.u32 4, %s26
          %s167 = ssub.s32 1024, 1024
          %168 = vsyncadd %s161, %s167
          %s169 = smul.addr %s165, 4
          %s170 = smul.addr %s25, 16
          %s171 = sadd.s32 %s169, %s170
          %s172 = smul.addr %s171, 64
          %s173 = scalar_lea.hbm %s0, %s172
          %s174 = sshll.u32 %s164, 4
          %s175 = int_to_ptr.vmem [resolvable:$true] %s174
          %180 = dma.hbm_to_vmem [thread:$0]  %s173, 1024, %s175, %s161, 256, 256, 16
        $region20: #{tpu_custom_call.1} parent=15 // pred_fallthru
          _
        // Predicated region
        $region21: #{tpu_custom_call.1} parent=15 // pred_check
          %p181 = pneg %p78
        $region22: #{tpu_custom_call.1} parent=15 // pred_check_branch
          %183 = sbr.rel (%p181) target = $region24
        $region23: #{tpu_custom_call.1} parent=15 // pred_region
          %s184 = sand.u32 %s68, 1
          %s185 = scalar_lea.sflag [#allocation6], %s184
          %s186 = sand.u32 %s68, 1
          %s187 = smul.addr %s186, 768
          %s188 = scalar_lea.vmem [#allocation5], %s187
          %s190 = ssub.s32 12288, 12288
          %191 = vsyncadd %s185, %s190
          %s192 = smul.addr %s25, 192
          %s193 = smul.addr %s192, 64
          %s194 = scalar_lea.hbm %s1, %s193
          %s195 = sshll.u32 %s188, 4
          %s196 = int_to_ptr.vmem [resolvable:$true] %s195
          %201 = dma.hbm_to_vmem [thread:$0]  %s194, 12288, %s196, %s185, 192, 192, 12
        $region24: #{tpu_custom_call.1} parent=15 // pred_fallthru
          _
        // Predicated region
        $region25: #{tpu_custom_call.1} parent=15 // pred_check
          %p202 = pneg %p104
        $region26: #{tpu_custom_call.1} parent=15 // pred_check_branch
          %204 = sbr.rel (%p202) target = $region28
        $region27: #{tpu_custom_call.1} parent=15 // pred_region
          %p205 = scmp.lt.s32.totalorder %s25, 1
          %s206 = scalar_select %p205, %s25, 1
          %s207 = smul.addr %s206, 3
          %s208 = scalar_lea.vmem %s2, %s207
        $region28: #{tpu_custom_call.1} parent=15 // pred_fallthru
          _
      $region16: #{tpu_custom_call.1} parent=5 // pred_fallthru
        _
      %p209 = scmp.le.s32.totalorder 1, %s18
      %p210 = scmp.lt.s32.totalorder %s18, 3
      %p211 = pnand %p209, %p210
      %p212 = pneg %p211
      // Predicated region
      $region29: #{tpu_custom_call.1} parent=5 // pred_check
        _
      $region30: #{tpu_custom_call.1} parent=5 // pred_check_branch
        %214 = sbr.rel (%p211) target = $region32
      $region31: #{tpu_custom_call.1} parent=5 // pred_region
        %s215 = ssub.s32 %s18, 1
        %s216 = sand.u32 %s45, 1
        %s217 = scalar_lea.sflag [#allocation3], %s216
        %s218 = sand.u32 %s45, 1
        %s219 = smul.addr %s218, 64
        %s220 = scalar_lea.vmem [#allocation2], %s219
        // Predicated region
        $region33: #{tpu_custom_call.1} parent=31 // pred_check
          %p221 = pneg %p58
        $region34: #{tpu_custom_call.1} parent=31 // pred_check_branch
          %223 = sbr.rel (%p221) target = $region36
        $region35: #{tpu_custom_call.1} parent=31 // pred_region
          %224 = dma.done %s217, 1024
        $region36: #{tpu_custom_call.1} parent=31 // pred_fallthru
          _
        %s225 = sand.u32 %s71, 1
        %s226 = scalar_lea.sflag [#allocation6], %s225
        %s227 = sand.u32 %s71, 1
        %s228 = smul.addr %s227, 768
        %s229 = scalar_lea.vmem [#allocation5], %s228
        // Predicated region
        $region37: #{tpu_custom_call.1} parent=31 // pred_check
          %p230 = pneg %p84
        $region38: #{tpu_custom_call.1} parent=31 // pred_check_branch
          %232 = sbr.rel (%p230) target = $region40
        $region39: #{tpu_custom_call.1} parent=31 // pred_region
          %233 = dma.done %s226, 12288
        $region40: #{tpu_custom_call.1} parent=31 // pred_fallthru
          _
        %s234 = sand.u32 %s45, 1
        %s235 = scalar_lea.sflag [#allocation3], %s234
        %s236 = sand.u32 %s45, 1
        %s237 = smul.addr %s236, 64
        %s238 = scalar_lea.vmem [#allocation2], %s237
        %p239 = pneg %p58
        %p240 = pneg %p55
        %s241 = sand.u32 %s71, 1
        %s242 = scalar_lea.sflag [#allocation6], %s241
        %s243 = sand.u32 %s71, 1
        %s244 = smul.addr %s243, 768
        %s245 = scalar_lea.vmem [#allocation5], %s244
        %p246 = pneg %p84
        %p247 = pneg %p81
        %p248 = scmp.lt.s32.totalorder %s27, 1
        %s249 = scalar_select %p248, %s27, 1
        %s250 = smul.addr %s249, 3
        %s251 = scalar_lea.vmem %s2, %s250
        %p252 = pneg %p110
        %p253 = pneg %p107
        %p254 = pneg %p138
        %p255 = pneg %p135
        %s256 = sand.u32 %s125, 1
        %s257 = scalar_lea.sflag [#allocation4], %s256
        %s258 = sand.u32 %s125, 1
        %s259 = smul.addr %s258, 96
        %s260 = scalar_lea.vmem [#allocation7], %s259
        %s261 = smul.u32 4, %s28
        %p262 = scmp.lt.s32.totalorder %s27, 1
        %s263 = scalar_select %p262, %s27, 1
        %s264 = smul.addr %s263, 3
        %s265 = scalar_lea.vmem %s2, %s264
        %s266 = smul.u32 4, %s28
        %v268 = vld [vmem:[%s220] sm:$0xff]
        %v269 = vld [vmem:[%s220 + $0x8] sm:$0xff]
        %v270 = vld [vmem:[%s220 + $0x10] sm:$0xff]
        %v271 = vld [vmem:[%s220 + $0x18] sm:$0xff]
        %v272 = vld [vmem:[%s220 + $0x20] sm:$0xff]
        %v273 = vld [vmem:[%s220 + $0x28] sm:$0xff]
        %v274 = vld [vmem:[%s220 + $0x30] sm:$0xff]
        %v275 = vld [vmem:[%s220 + $0x38] sm:$0xff]
        %v276 = vld [vmem:[%s229] sm:$0xff]
        %v277 = vld [vmem:[%s229 + $0x8] sm:$0xf]
        %v278 = vld [vmem:[%s229 + $0xc] sm:$0xff]
        %v279 = vld [vmem:[%s229 + $0x14] sm:$0xf]
        %v280 = vld [vmem:[%s229 + $0x18] sm:$0xff]
        %v281 = vld [vmem:[%s229 + $0x20] sm:$0xf]
        %v282 = vld [vmem:[%s229 + $0x24] sm:$0xff]
        %v283 = vld [vmem:[%s229 + $0x2c] sm:$0xf]
        %v284 = vld [vmem:[%s229 + $0x30] sm:$0xff]
        %v285 = vld [vmem:[%s229 + $0x38] sm:$0xf]
        %v286 = vld [vmem:[%s229 + $0x3c] sm:$0xff]
        %v287 = vld [vmem:[%s229 + $0x44] sm:$0xf]
        %v288 = vld [vmem:[%s229 + $0x48] sm:$0xff]
        %v289 = vld [vmem:[%s229 + $0x50] sm:$0xf]
        %v290 = vld [vmem:[%s229 + $0x54] sm:$0xff]
        %v291 = vld [vmem:[%s229 + $0x5c] sm:$0xf]
        %v292 = vld [vmem:[%s229 + $0x60] sm:$0xff]
        %v293 = vld [vmem:[%s229 + $0x68] sm:$0xf]
        %v294 = vld [vmem:[%s229 + $0x6c] sm:$0xff]
        %v295 = vld [vmem:[%s229 + $0x74] sm:$0xf]
        %v296 = vld [vmem:[%s229 + $0x78] sm:$0xff]
        %v297 = vld [vmem:[%s229 + $0x80] sm:$0xf]
        %v298 = vld [vmem:[%s229 + $0x84] sm:$0xff]
        %v299 = vld [vmem:[%s229 + $0x8c] sm:$0xf]
        %v300 = vld [vmem:[%s229 + $0x90] sm:$0xff]
        %v301 = vld [vmem:[%s229 + $0x98] sm:$0xf]
        %v302 = vld [vmem:[%s229 + $0x9c] sm:$0xff]
        %v303 = vld [vmem:[%s229 + $0xa4] sm:$0xf]
        %v304 = vld [vmem:[%s229 + $0xa8] sm:$0xff]
        %v305 = vld [vmem:[%s229 + $0xb0] sm:$0xf]
        %v306 = vld [vmem:[%s229 + $0xb4] sm:$0xff]
        %v307 = vld [vmem:[%s229 + $0xbc] sm:$0xf]
        %v308 = vld [vmem:[%s229 + $0xc0] sm:$0xff]
        %v309 = vld [vmem:[%s229 + $0xc8] sm:$0xf]
        %v310 = vld [vmem:[%s229 + $0xcc] sm:$0xff]
        %v311 = vld [vmem:[%s229 + $0xd4] sm:$0xf]
        %v312 = vld [vmem:[%s229 + $0xd8] sm:$0xff]
        %v313 = vld [vmem:[%s229 + $0xe0] sm:$0xf]
        %v314 = vld [vmem:[%s229 + $0xe4] sm:$0xff]
        %v315 = vld [vmem:[%s229 + $0xec] sm:$0xf]
        %v316 = vld [vmem:[%s229 + $0xf0] sm:$0xff]
        %v317 = vld [vmem:[%s229 + $0xf8] sm:$0xf]
        %v318 = vld [vmem:[%s229 + $0xfc] sm:$0xff]
        %v319 = vld [vmem:[%s229 + $0x104] sm:$0xf]
        %v320 = vld [vmem:[%s229 + $0x108] sm:$0xff]
        %v321 = vld [vmem:[%s229 + $0x110] sm:$0xf]
        %v322 = vld [vmem:[%s229 + $0x114] sm:$0xff]
        %v323 = vld [vmem:[%s229 + $0x11c] sm:$0xf]
        %v324 = vld [vmem:[%s229 + $0x120] sm:$0xff]
        %v325 = vld [vmem:[%s229 + $0x128] sm:$0xf]
        %v326 = vld [vmem:[%s229 + $0x12c] sm:$0xff]
        %v327 = vld [vmem:[%s229 + $0x134] sm:$0xf]
        %v328 = vld [vmem:[%s229 + $0x138] sm:$0xff]
        %v329 = vld [vmem:[%s229 + $0x140] sm:$0xf]
        %v330 = vld [vmem:[%s229 + $0x144] sm:$0xff]
        %v331 = vld [vmem:[%s229 + $0x14c] sm:$0xf]
        %v332 = vld [vmem:[%s229 + $0x150] sm:$0xff]
        %v333 = vld [vmem:[%s229 + $0x158] sm:$0xf]
        %v334 = vld [vmem:[%s229 + $0x15c] sm:$0xff]
        %v335 = vld [vmem:[%s229 + $0x164] sm:$0xf]
        %v336 = vld [vmem:[%s229 + $0x168] sm:$0xff]
        %v337 = vld [vmem:[%s229 + $0x170] sm:$0xf]
        %v338 = vld [vmem:[%s229 + $0x174] sm:$0xff]
        %v339 = vld [vmem:[%s229 + $0x17c] sm:$0xf]
        %v340 = vld [vmem:[%s229 + $0x180] sm:$0xff]
        %v341 = vld [vmem:[%s229 + $0x188] sm:$0xf]
        %v342 = vld [vmem:[%s229 + $0x18c] sm:$0xff]
        %v343 = vld [vmem:[%s229 + $0x194] sm:$0xf]
        %v344 = vld [vmem:[%s229 + $0x198] sm:$0xff]
        %v345 = vld [vmem:[%s229 + $0x1a0] sm:$0xf]
        %v346 = vld [vmem:[%s229 + $0x1a4] sm:$0xff]
        %v347 = vld [vmem:[%s229 + $0x1ac] sm:$0xf]
        %v348 = vld [vmem:[%s229 + $0x1b0] sm:$0xff]
        %v349 = vld [vmem:[%s229 + $0x1b8] sm:$0xf]
        %v350 = vld [vmem:[%s229 + $0x1bc] sm:$0xff]
        %v351 = vld [vmem:[%s229 + $0x1c4] sm:$0xf]
        %v352 = vld [vmem:[%s229 + $0x1c8] sm:$0xff]
        %v353 = vld [vmem:[%s229 + $0x1d0] sm:$0xf]
        %v354 = vld [vmem:[%s229 + $0x1d4] sm:$0xff]
        %v355 = vld [vmem:[%s229 + $0x1dc] sm:$0xf]
        %v356 = vld [vmem:[%s229 + $0x1e0] sm:$0xff]
        %v357 = vld [vmem:[%s229 + $0x1e8] sm:$0xf]
        %v358 = vld [vmem:[%s229 + $0x1ec] sm:$0xff]
        %v359 = vld [vmem:[%s229 + $0x1f4] sm:$0xf]
        %v360 = vld [vmem:[%s229 + $0x1f8] sm:$0xff]
        %v361 = vld [vmem:[%s229 + $0x200] sm:$0xf]
        %v362 = vld [vmem:[%s229 + $0x204] sm:$0xff]
        %v363 = vld [vmem:[%s229 + $0x20c] sm:$0xf]
        %v364 = vld [vmem:[%s229 + $0x210] sm:$0xff]
        %v365 = vld [vmem:[%s229 + $0x218] sm:$0xf]
        %v366 = vld [vmem:[%s229 + $0x21c] sm:$0xff]
        %v367 = vld [vmem:[%s229 + $0x224] sm:$0xf]
        %v368 = vld [vmem:[%s229 + $0x228] sm:$0xff]
        %v369 = vld [vmem:[%s229 + $0x230] sm:$0xf]
        %v370 = vld [vmem:[%s229 + $0x234] sm:$0xff]
        %v371 = vld [vmem:[%s229 + $0x23c] sm:$0xf]
        %v372 = vld [vmem:[%s229 + $0x240] sm:$0xff]
        %v373 = vld [vmem:[%s229 + $0x248] sm:$0xf]
        %v374 = vld [vmem:[%s229 + $0x24c] sm:$0xff]
        %v375 = vld [vmem:[%s229 + $0x254] sm:$0xf]
        %v376 = vld [vmem:[%s229 + $0x258] sm:$0xff]
        %v377 = vld [vmem:[%s229 + $0x260] sm:$0xf]
        %v378 = vld [vmem:[%s229 + $0x264] sm:$0xff]
        %v379 = vld [vmem:[%s229 + $0x26c] sm:$0xf]
        %v380 = vld [vmem:[%s229 + $0x270] sm:$0xff]
        %v381 = vld [vmem:[%s229 + $0x278] sm:$0xf]
        %v382 = vld [vmem:[%s229 + $0x27c] sm:$0xff]
        %v383 = vld [vmem:[%s229 + $0x284] sm:$0xf]
        %v384 = vld [vmem:[%s229 + $0x288] sm:$0xff]
        %v385 = vld [vmem:[%s229 + $0x290] sm:$0xf]
        %v386 = vld [vmem:[%s229 + $0x294] sm:$0xff]
        %v387 = vld [vmem:[%s229 + $0x29c] sm:$0xf]
        %v388 = vld [vmem:[%s229 + $0x2a0] sm:$0xff]
        %v389 = vld [vmem:[%s229 + $0x2a8] sm:$0xf]
        %v390 = vld [vmem:[%s229 + $0x2ac] sm:$0xff]
        %v391 = vld [vmem:[%s229 + $0x2b4] sm:$0xf]
        %v392 = vld [vmem:[%s229 + $0x2b8] sm:$0xff]
        %v393 = vld [vmem:[%s229 + $0x2c0] sm:$0xf]
        %v394 = vld [vmem:[%s229 + $0x2c4] sm:$0xff]
        %v395 = vld [vmem:[%s229 + $0x2cc] sm:$0xf]
        %v396 = vld [vmem:[%s229 + $0x2d0] sm:$0xff]
        %v397 = vld [vmem:[%s229 + $0x2d8] sm:$0xf]
        %v398 = vld [vmem:[%s229 + $0x2dc] sm:$0xff]
        %v399 = vld [vmem:[%s229 + $0x2e4] sm:$0xf]
        %v400 = vld [vmem:[%s229 + $0x2e8] sm:$0xff]
        %v401 = vld [vmem:[%s229 + $0x2f0] sm:$0xf]
        %v402 = vld [vmem:[%s229 + $0x2f4] sm:$0xff]
        %v403 = vld [vmem:[%s229 + $0x2fc] sm:$0xf]
        %v404 = vld [vmem:[%s265] sm:$0x7]
        %v406 = vlaneseq
        %v407 = vshrl.u32 %v406, 7
        %v408 = vsub.s32 0, %v407
        %v409 = vrot.slane %v404, %v408
        %v410 = vlaneseq
        %v411 = vshrl.u32 %v410, 7
        %v412 = vsub.s32 1, %v411
        %v413 = vrot.slane %v404, %v412
        %v414 = vlaneseq
        %v415 = vshrl.u32 %v414, 7
        %v416 = vsub.s32 2, %v415
        %v417 = vrot.slane %v404, %v416
        %v429 = vunpack.c.l.b16 %v268
        %v430 = vunpack.c.h.b16 %v268
        %v431 = vunpack.c.l.b16 %v269
        %v432 = vunpack.c.h.b16 %v269
        %v433 = vunpack.c.l.b16 %v270
        %v434 = vunpack.c.h.b16 %v270
        %v435 = vunpack.c.l.b16 %v271
        %v436 = vunpack.c.h.b16 %v271
        %v437 = vunpack.c.l.b16 %v272
        %v438 = vunpack.c.h.b16 %v272
        %v439 = vunpack.c.l.b16 %v273
        %v440 = vunpack.c.h.b16 %v273
        %v441 = vunpack.c.l.b16 %v274
        %v442 = vunpack.c.h.b16 %v274
        %v443 = vunpack.c.l.b16 %v275
        %v444 = vunpack.c.h.b16 %v275
        %v445 = vpack.c.b16 %v433, %v429
        %v446 = vpack.c.b16 %v434, %v430
        %v447 = vpack.c.b16 %v435, %v431
        %v448 = vpack.c.b16 %v436, %v432
        %v449 = vpack.c.b16 %v441, %v437
        %v450 = vpack.c.b16 %v442, %v438
        %v451 = vpack.c.b16 %v443, %v439
        %v452 = vpack.c.b16 %v444, %v440
        %v589 = vunpack.c.l.b16 %v276
        %v590 = vunpack.c.h.b16 %v276
        %v591 = vunpack.c.l.b16 %v277
        %v592 = vunpack.c.l.b16 %v278
        %v593 = vunpack.c.h.b16 %v278
        %v594 = vunpack.c.l.b16 %v279
        %v595 = vunpack.c.l.b16 %v280
        %v596 = vunpack.c.h.b16 %v280
        %v597 = vunpack.c.l.b16 %v281
        %v598 = vunpack.c.l.b16 %v282
        %v599 = vunpack.c.h.b16 %v282
        %v600 = vunpack.c.l.b16 %v283
        %v601 = vunpack.c.l.b16 %v284
        %v602 = vunpack.c.h.b16 %v284
        %v603 = vunpack.c.l.b16 %v285
        %v604 = vunpack.c.l.b16 %v286
        %v605 = vunpack.c.h.b16 %v286
        %v606 = vunpack.c.l.b16 %v287
        %v607 = vunpack.c.l.b16 %v288
        %v608 = vunpack.c.h.b16 %v288
        %v609 = vunpack.c.l.b16 %v289
        %v610 = vunpack.c.l.b16 %v290
        %v611 = vunpack.c.h.b16 %v290
        %v612 = vunpack.c.l.b16 %v291
        %v613 = vunpack.c.l.b16 %v292
        %v614 = vunpack.c.h.b16 %v292
        %v615 = vunpack.c.l.b16 %v293
        %v616 = vunpack.c.l.b16 %v294
        %v617 = vunpack.c.h.b16 %v294
        %v618 = vunpack.c.l.b16 %v295
        %v619 = vunpack.c.l.b16 %v296
        %v620 = vunpack.c.h.b16 %v296
        %v621 = vunpack.c.l.b16 %v297
        %v622 = vunpack.c.l.b16 %v298
        %v623 = vunpack.c.h.b16 %v298
        %v624 = vunpack.c.l.b16 %v299
        %v625 = vunpack.c.l.b16 %v300
        %v626 = vunpack.c.h.b16 %v300
        %v627 = vunpack.c.l.b16 %v301
        %v628 = vunpack.c.l.b16 %v302
        %v629 = vunpack.c.h.b16 %v302
        %v630 = vunpack.c.l.b16 %v303
        %v631 = vunpack.c.l.b16 %v304
        %v632 = vunpack.c.h.b16 %v304
        %v633 = vunpack.c.l.b16 %v305
        %v634 = vunpack.c.l.b16 %v306
        %v635 = vunpack.c.h.b16 %v306
        %v636 = vunpack.c.l.b16 %v307
        %v637 = vunpack.c.l.b16 %v308
        %v638 = vunpack.c.h.b16 %v308
        %v639 = vunpack.c.l.b16 %v309
        %v640 = vunpack.c.l.b16 %v310
        %v641 = vunpack.c.h.b16 %v310
        %v642 = vunpack.c.l.b16 %v311
        %v643 = vunpack.c.l.b16 %v312
        %v644 = vunpack.c.h.b16 %v312
        %v645 = vunpack.c.l.b16 %v313
        %v646 = vunpack.c.l.b16 %v314
        %v647 = vunpack.c.h.b16 %v314
        %v648 = vunpack.c.l.b16 %v315
        %v649 = vunpack.c.l.b16 %v316
        %v650 = vunpack.c.h.b16 %v316
        %v651 = vunpack.c.l.b16 %v317
        %v652 = vunpack.c.l.b16 %v318
        %v653 = vunpack.c.h.b16 %v318
        %v654 = vunpack.c.l.b16 %v319
        %v655 = vunpack.c.l.b16 %v320
        %v656 = vunpack.c.h.b16 %v320
        %v657 = vunpack.c.l.b16 %v321
        %v658 = vunpack.c.l.b16 %v322
        %v659 = vunpack.c.h.b16 %v322
        %v660 = vunpack.c.l.b16 %v323
        %v661 = vunpack.c.l.b16 %v324
        %v662 = vunpack.c.h.b16 %v324
        %v663 = vunpack.c.l.b16 %v325
        %v664 = vunpack.c.l.b16 %v326
        %v665 = vunpack.c.h.b16 %v326
        %v666 = vunpack.c.l.b16 %v327
        %v667 = vunpack.c.l.b16 %v328
        %v668 = vunpack.c.h.b16 %v328
        %v669 = vunpack.c.l.b16 %v329
        %v670 = vunpack.c.l.b16 %v330
        %v671 = vunpack.c.h.b16 %v330
        %v672 = vunpack.c.l.b16 %v331
        %v673 = vunpack.c.l.b16 %v332
        %v674 = vunpack.c.h.b16 %v332
        %v675 = vunpack.c.l.b16 %v333
        %v676 = vunpack.c.l.b16 %v334
        %v677 = vunpack.c.h.b16 %v334
        %v678 = vunpack.c.l.b16 %v335
        %v679 = vunpack.c.l.b16 %v336
        %v680 = vunpack.c.h.b16 %v336
        %v681 = vunpack.c.l.b16 %v337
        %v682 = vunpack.c.l.b16 %v338
        %v683 = vunpack.c.h.b16 %v338
        %v684 = vunpack.c.l.b16 %v339
        %v685 = vunpack.c.l.b16 %v340
        %v686 = vunpack.c.h.b16 %v340
        %v687 = vunpack.c.l.b16 %v341
        %v688 = vunpack.c.l.b16 %v342
        %v689 = vunpack.c.h.b16 %v342
        %v690 = vunpack.c.l.b16 %v343
        %v691 = vunpack.c.l.b16 %v344
        %v692 = vunpack.c.h.b16 %v344
        %v693 = vunpack.c.l.b16 %v345
        %v694 = vunpack.c.l.b16 %v346
        %v695 = vunpack.c.h.b16 %v346
        %v696 = vunpack.c.l.b16 %v347
        %v697 = vunpack.c.l.b16 %v348
        %v698 = vunpack.c.h.b16 %v348
        %v699 = vunpack.c.l.b16 %v349
        %v700 = vunpack.c.l.b16 %v350
        %v701 = vunpack.c.h.b16 %v350
        %v702 = vunpack.c.l.b16 %v351
        %v703 = vunpack.c.l.b16 %v352
        %v704 = vunpack.c.h.b16 %v352
        %v705 = vunpack.c.l.b16 %v353
        %v706 = vunpack.c.l.b16 %v354
        %v707 = vunpack.c.h.b16 %v354
        %v708 = vunpack.c.l.b16 %v355
        %v709 = vunpack.c.l.b16 %v356
        %v710 = vunpack.c.h.b16 %v356
        %v711 = vunpack.c.l.b16 %v357
        %v712 = vunpack.c.l.b16 %v358
        %v713 = vunpack.c.h.b16 %v358
        %v714 = vunpack.c.l.b16 %v359
        %v715 = vunpack.c.l.b16 %v360
        %v716 = vunpack.c.h.b16 %v360
        %v717 = vunpack.c.l.b16 %v361
        %v718 = vunpack.c.l.b16 %v362
        %v719 = vunpack.c.h.b16 %v362
        %v720 = vunpack.c.l.b16 %v363
        %v721 = vunpack.c.l.b16 %v364
        %v722 = vunpack.c.h.b16 %v364
        %v723 = vunpack.c.l.b16 %v365
        %v724 = vunpack.c.l.b16 %v366
        %v725 = vunpack.c.h.b16 %v366
        %v726 = vunpack.c.l.b16 %v367
        %v727 = vunpack.c.l.b16 %v368
        %v728 = vunpack.c.h.b16 %v368
        %v729 = vunpack.c.l.b16 %v369
        %v730 = vunpack.c.l.b16 %v370
        %v731 = vunpack.c.h.b16 %v370
        %v732 = vunpack.c.l.b16 %v371
        %v733 = vunpack.c.l.b16 %v372
        %v734 = vunpack.c.h.b16 %v372
        %v735 = vunpack.c.l.b16 %v373
        %v736 = vunpack.c.l.b16 %v374
        %v737 = vunpack.c.h.b16 %v374
        %v738 = vunpack.c.l.b16 %v375
        %v739 = vunpack.c.l.b16 %v376
        %v740 = vunpack.c.h.b16 %v376
        %v741 = vunpack.c.l.b16 %v377
        %v742 = vunpack.c.l.b16 %v378
        %v743 = vunpack.c.h.b16 %v378
        %v744 = vunpack.c.l.b16 %v379
        %v745 = vunpack.c.l.b16 %v380
        %v746 = vunpack.c.h.b16 %v380
        %v747 = vunpack.c.l.b16 %v381
        %v748 = vunpack.c.l.b16 %v382
        %v749 = vunpack.c.h.b16 %v382
        %v750 = vunpack.c.l.b16 %v383
        %v751 = vunpack.c.l.b16 %v384
        %v752 = vunpack.c.h.b16 %v384
        %v753 = vunpack.c.l.b16 %v385
        %v754 = vunpack.c.l.b16 %v386
        %v755 = vunpack.c.h.b16 %v386
        %v756 = vunpack.c.l.b16 %v387
        %v757 = vunpack.c.l.b16 %v388
        %v758 = vunpack.c.h.b16 %v388
        %v759 = vunpack.c.l.b16 %v389
        %v760 = vunpack.c.l.b16 %v390
        %v761 = vunpack.c.h.b16 %v390
        %v762 = vunpack.c.l.b16 %v391
        %v763 = vunpack.c.l.b16 %v392
        %v764 = vunpack.c.h.b16 %v392
        %v765 = vunpack.c.l.b16 %v393
        %v766 = vunpack.c.l.b16 %v394
        %v767 = vunpack.c.h.b16 %v394
        %v768 = vunpack.c.l.b16 %v395
        %v769 = vunpack.c.l.b16 %v396
        %v770 = vunpack.c.h.b16 %v396
        %v771 = vunpack.c.l.b16 %v397
        %v772 = vunpack.c.l.b16 %v398
        %v773 = vunpack.c.h.b16 %v398
        %v774 = vunpack.c.l.b16 %v399
        %v775 = vunpack.c.l.b16 %v400
        %v776 = vunpack.c.h.b16 %v400
        %v777 = vunpack.c.l.b16 %v401
        %v778 = vunpack.c.l.b16 %v402
        %v779 = vunpack.c.h.b16 %v402
        %v780 = vunpack.c.l.b16 %v403
        %v781 = vpack.c.b16 %v592, %v589
        %v782 = vpack.c.b16 %v593, %v590
        %v783 = vpack.c.b16 %v594, %v591
        %v784 = vpack.c.b16 %v598, %v595
        %v785 = vpack.c.b16 %v599, %v596
        %v786 = vpack.c.b16 %v600, %v597
        %v787 = vpack.c.b16 %v604, %v601
        %v788 = vpack.c.b16 %v605, %v602
        %v789 = vpack.c.b16 %v606, %v603
        %v790 = vpack.c.b16 %v610, %v607
        %v791 = vpack.c.b16 %v611, %v608
        %v792 = vpack.c.b16 %v612, %v609
        %v793 = vpack.c.b16 %v616, %v613
        %v794 = vpack.c.b16 %v617, %v614
        %v795 = vpack.c.b16 %v618, %v615
        %v796 = vpack.c.b16 %v622, %v619
        %v797 = vpack.c.b16 %v623, %v620
        %v798 = vpack.c.b16 %v624, %v621
        %v799 = vpack.c.b16 %v628, %v625
        %v800 = vpack.c.b16 %v629, %v626
        %v801 = vpack.c.b16 %v630, %v627
        %v802 = vpack.c.b16 %v634, %v631
        %v803 = vpack.c.b16 %v635, %v632
        %v804 = vpack.c.b16 %v636, %v633
        %v805 = vpack.c.b16 %v640, %v637
        %v806 = vpack.c.b16 %v641, %v638
        %v807 = vpack.c.b16 %v642, %v639
        %v808 = vpack.c.b16 %v646, %v643
        %v809 = vpack.c.b16 %v647, %v644
        %v810 = vpack.c.b16 %v648, %v645
        %v811 = vpack.c.b16 %v652, %v649
        %v812 = vpack.c.b16 %v653, %v650
        %v813 = vpack.c.b16 %v654, %v651
        %v814 = vpack.c.b16 %v658, %v655
        %v815 = vpack.c.b16 %v659, %v656
        %v816 = vpack.c.b16 %v660, %v657
        %v817 = vpack.c.b16 %v664, %v661
        %v818 = vpack.c.b16 %v665, %v662
        %v819 = vpack.c.b16 %v666, %v663
        %v820 = vpack.c.b16 %v670, %v667
        %v821 = vpack.c.b16 %v671, %v668
        %v822 = vpack.c.b16 %v672, %v669
        %v823 = vpack.c.b16 %v676, %v673
        %v824 = vpack.c.b16 %v677, %v674
        %v825 = vpack.c.b16 %v678, %v675
        %v826 = vpack.c.b16 %v682, %v679
        %v827 = vpack.c.b16 %v683, %v680
        %v828 = vpack.c.b16 %v684, %v681
        %v829 = vpack.c.b16 %v688, %v685
        %v830 = vpack.c.b16 %v689, %v686
        %v831 = vpack.c.b16 %v690, %v687
        %v832 = vpack.c.b16 %v694, %v691
        %v833 = vpack.c.b16 %v695, %v692
        %v834 = vpack.c.b16 %v696, %v693
        %v835 = vpack.c.b16 %v700, %v697
        %v836 = vpack.c.b16 %v701, %v698
        %v837 = vpack.c.b16 %v702, %v699
        %v838 = vpack.c.b16 %v706, %v703
        %v839 = vpack.c.b16 %v707, %v704
        %v840 = vpack.c.b16 %v708, %v705
        %v841 = vpack.c.b16 %v712, %v709
        %v842 = vpack.c.b16 %v713, %v710
        %v843 = vpack.c.b16 %v714, %v711
        %v844 = vpack.c.b16 %v718, %v715
        %v845 = vpack.c.b16 %v719, %v716
        %v846 = vpack.c.b16 %v720, %v717
        %v847 = vpack.c.b16 %v724, %v721
        %v848 = vpack.c.b16 %v725, %v722
        %v849 = vpack.c.b16 %v726, %v723
        %v850 = vpack.c.b16 %v730, %v727
        %v851 = vpack.c.b16 %v731, %v728
        %v852 = vpack.c.b16 %v732, %v729
        %v853 = vpack.c.b16 %v736, %v733
        %v854 = vpack.c.b16 %v737, %v734
        %v855 = vpack.c.b16 %v738, %v735
        %v856 = vpack.c.b16 %v742, %v739
        %v857 = vpack.c.b16 %v743, %v740
        %v858 = vpack.c.b16 %v744, %v741
        %v859 = vpack.c.b16 %v748, %v745
        %v860 = vpack.c.b16 %v749, %v746
        %v861 = vpack.c.b16 %v750, %v747
        %v862 = vpack.c.b16 %v754, %v751
        %v863 = vpack.c.b16 %v755, %v752
        %v864 = vpack.c.b16 %v756, %v753
        %v865 = vpack.c.b16 %v760, %v757
        %v866 = vpack.c.b16 %v761, %v758
        %v867 = vpack.c.b16 %v762, %v759
        %v868 = vpack.c.b16 %v766, %v763
        %v869 = vpack.c.b16 %v767, %v764
        %v870 = vpack.c.b16 %v768, %v765
        %v871 = vpack.c.b16 %v772, %v769
        %v872 = vpack.c.b16 %v773, %v770
        %v873 = vpack.c.b16 %v774, %v771
        %v874 = vpack.c.b16 %v778, %v775
        %v875 = vpack.c.b16 %v779, %v776
        %v876 = vpack.c.b16 %v780, %v777
        %973 = vmatprep.subr.bf16.mxu0 %v782
        %974 = vmatpush1.bf16.msra.mxu0 %v781
        %975 = vmatprep.subr.bf16.mxu0 %v785
        %976 = vmatpush1.bf16.msra.mxu0 %v784
        %977 = vmatprep.subr.bf16.mxu0 %v788
        %978 = vmatpush1.bf16.msra.mxu0 %v787
        %979 = vmatprep.subr.bf16.mxu0 %v791
        %980 = vmatpush1.bf16.msra.mxu0 %v790
        %981 = vmatprep.subr.bf16.mxu0 %v794
        %982 = vmatpush1.bf16.msra.mxu0 %v793
        %983 = vmatprep.subr.bf16.mxu0 %v797
        %984 = vmatpush1.bf16.msra.mxu0 %v796
        %985 = vmatprep.subr.bf16.mxu0 %v800
        %986 = vmatpush1.bf16.msra.mxu0 %v799
        %987 = vmatprep.subr.bf16.mxu0 %v803
        %988 = vmatpush1.bf16.msra.mxu0 %v802
        %989 = vmatprep.subr.bf16.mxu0 %v806
        %990 = vmatpush1.bf16.msra.mxu0 %v805
        %991 = vmatprep.subr.bf16.mxu0 %v809
        %992 = vmatpush1.bf16.msra.mxu0 %v808
        %993 = vmatprep.subr.bf16.mxu0 %v812
        %994 = vmatpush1.bf16.msra.mxu0 %v811
        %995 = vmatprep.subr.bf16.mxu0 %v815
        %996 = vmatpush1.bf16.msra.mxu0 %v814
        %997 = vmatprep.subr.bf16.mxu0 %v818
        %998 = vmatpush1.bf16.msra.mxu0 %v817
        %999 = vmatprep.subr.bf16.mxu0 %v821
        %1000 = vmatpush1.bf16.msra.mxu0 %v820
        %1001 = vmatprep.subr.bf16.mxu0 %v824
        %1002 = vmatpush1.bf16.msra.mxu0 %v823
        %1003 = vmatprep.subr.bf16.mxu0 %v827
        %1004 = vmatpush1.bf16.msra.mxu0 %v826
        %1005 = vmatprep.mubr.bf16.mxu0 %v446
        %1006 = vmatmul.mubr.bf16.gmra.mrb[0].mxu0 %v445
        %v1007 = vpop.f32.mrb[0].mxu0
        %v1008 = vadd.f32 %v409, %v1007
        %v1009 = vpop.f32.mrb[0].mxu0
        %v1010 = vadd.f32 %v413, %v1009
        %v1011 = vpop.f32.mrb[0].mxu0
        %v1012 = vadd.f32 %v409, %v1011
        %v1013 = vpop.f32.mrb[0].mxu0
        %v1014 = vadd.f32 %v413, %v1013
        %1015 = vmatprep.mubr.bf16.mxu0 %v450
        %1016 = vmatmul.mubr.bf16.gmra.mrb[0].mxu0 %v449
        %v1017 = vpop.f32.mrb[0].mxu0
        %v1018 = vadd.f32 %v409, %v1017
        %v1019 = vpop.f32.mrb[0].mxu0
        %v1020 = vadd.f32 %v413, %v1019
        %v1021 = vpop.f32.mrb[0].mxu0
        %v1022 = vadd.f32 %v409, %v1021
        %v1023 = vpop.f32.mrb[0].mxu0
        %v1024 = vadd.f32 %v413, %v1023
        %1025 = vdwg.mxu0
        %1026 = vmatprep.subr.bf16.mxu0 %v830
        %1027 = vmatpush1.bf16.msra.mxu0 %v829
        %1028 = vmatprep.subr.bf16.mxu0 %v833
        %1029 = vmatpush1.bf16.msra.mxu0 %v832
        %1030 = vmatprep.subr.bf16.mxu0 %v836
        %1031 = vmatpush1.bf16.msra.mxu0 %v835
        %1032 = vmatprep.subr.bf16.mxu0 %v839
        %1033 = vmatpush1.bf16.msra.mxu0 %v838
        %1034 = vmatprep.subr.bf16.mxu0 %v842
        %1035 = vmatpush1.bf16.msra.mxu0 %v841
        %1036 = vmatprep.subr.bf16.mxu0 %v845
        %1037 = vmatpush1.bf16.msra.mxu0 %v844
        %1038 = vmatprep.subr.bf16.mxu0 %v848
        %1039 = vmatpush1.bf16.msra.mxu0 %v847
        %1040 = vmatprep.subr.bf16.mxu0 %v851
        %1041 = vmatpush1.bf16.msra.mxu0 %v850
        %1042 = vmatprep.subr.bf16.mxu0 %v854
        %1043 = vmatpush1.bf16.msra.mxu0 %v853
        %1044 = vmatprep.subr.bf16.mxu0 %v857
        %1045 = vmatpush1.bf16.msra.mxu0 %v856
        %1046 = vmatprep.subr.bf16.mxu0 %v860
        %1047 = vmatpush1.bf16.msra.mxu0 %v859
        %1048 = vmatprep.subr.bf16.mxu0 %v863
        %1049 = vmatpush1.bf16.msra.mxu0 %v862
        %1050 = vmatprep.subr.bf16.mxu0 %v866
        %1051 = vmatpush1.bf16.msra.mxu0 %v865
        %1052 = vmatprep.subr.bf16.mxu0 %v869
        %1053 = vmatpush1.bf16.msra.mxu0 %v868
        %1054 = vmatprep.subr.bf16.mxu0 %v872
        %1055 = vmatpush1.bf16.msra.mxu0 %v871
        %1056 = vmatprep.subr.bf16.mxu0 %v875
        %1057 = vmatpush1.bf16.msra.mxu0 %v874
        %1058 = vmatprep.mubr.bf16.mxu0 %v448
        %1059 = vmatmul.mubr.bf16.gmra.mrb[0].mxu0 %v447
        %v1060 = vpop.f32.mrb[0].mxu0
        %v1061 = vadd.f32 %v1008, %v1060
        %v1062 = vpop.f32.mrb[0].mxu0
        %v1063 = vadd.f32 %v1010, %v1062
        %v1064 = vpop.f32.mrb[0].mxu0
        %v1065 = vadd.f32 %v1012, %v1064
        %v1066 = vpop.f32.mrb[0].mxu0
        %v1067 = vadd.f32 %v1014, %v1066
        %1068 = vmatprep.mubr.bf16.mxu0 %v452
        %1069 = vmatmul.mubr.bf16.gmra.mrb[0].mxu0 %v451
        %v1070 = vpop.f32.mrb[0].mxu0
        %v1071 = vadd.f32 %v1018, %v1070
        %v1072 = vpop.f32.mrb[0].mxu0
        %v1073 = vadd.f32 %v1020, %v1072
        %v1074 = vpop.f32.mrb[0].mxu0
        %v1075 = vadd.f32 %v1022, %v1074
        %v1076 = vpop.f32.mrb[0].mxu0
        %v1077 = vadd.f32 %v1024, %v1076
        %1078 = vdwg.mxu0
        %1079 = vmatprep.subr.bf16.mxu0 0
        %1080 = vmatpush1.bf16.msra.mxu0 %v783
        %1081 = vmatprep.subr.bf16.mxu0 0
        %1082 = vmatpush1.bf16.msra.mxu0 %v786
        %1083 = vmatprep.subr.bf16.mxu0 0
        %1084 = vmatpush1.bf16.msra.mxu0 %v789
        %1085 = vmatprep.subr.bf16.mxu0 0
        %1086 = vmatpush1.bf16.msra.mxu0 %v792
        %1087 = vmatprep.subr.bf16.mxu0 0
        %1088 = vmatpush1.bf16.msra.mxu0 %v795
        %1089 = vmatprep.subr.bf16.mxu0 0
        %1090 = vmatpush1.bf16.msra.mxu0 %v798
        %1091 = vmatprep.subr.bf16.mxu0 0
        %1092 = vmatpush1.bf16.msra.mxu0 %v801
        %1093 = vmatprep.subr.bf16.mxu0 0
        %1094 = vmatpush1.bf16.msra.mxu0 %v804
        %1095 = vmatprep.subr.bf16.mxu0 0
        %1096 = vmatpush1.bf16.msra.mxu0 %v807
        %1097 = vmatprep.subr.bf16.mxu0 0
        %1098 = vmatpush1.bf16.msra.mxu0 %v810
        %1099 = vmatprep.subr.bf16.mxu0 0
        %1100 = vmatpush1.bf16.msra.mxu0 %v813
        %1101 = vmatprep.subr.bf16.mxu0 0
        %1102 = vmatpush1.bf16.msra.mxu0 %v816
        %1103 = vmatprep.subr.bf16.mxu0 0
        %1104 = vmatpush1.bf16.msra.mxu0 %v819
        %1105 = vmatprep.subr.bf16.mxu0 0
        %1106 = vmatpush1.bf16.msra.mxu0 %v822
        %1107 = vmatprep.subr.bf16.mxu0 0
        %1108 = vmatpush1.bf16.msra.mxu0 %v825
        %1109 = vmatprep.subr.bf16.mxu0 0
        %1110 = vmatpush1.bf16.msra.mxu0 %v828
        %1111 = vmatprep.mubr.bf16.mxu0 %v446
        %1112 = vmatmul.mubr.bf16.gmra.mrb[0].mxu0 %v445
        %v1113 = vpop.f32.mrb[0].mxu0
        %v1114 = vadd.f32 %v417, %v1113
        %v1115 = vpop.f32.mrb[0].mxu0
        %v1116 = vpop.f32.mrb[0].mxu0
        %v1117 = vadd.f32 %v417, %v1116
        %v1118 = vpop.f32.mrb[0].mxu0
        %1119 = vmatprep.mubr.bf16.mxu0 %v450
        %1120 = vmatmul.mubr.bf16.gmra.mrb[0].mxu0 %v449
        %v1121 = vpop.f32.mrb[0].mxu0
        %v1122 = vadd.f32 %v417, %v1121
        %v1123 = vpop.f32.mrb[0].mxu0
        %v1124 = vpop.f32.mrb[0].mxu0
        %v1125 = vadd.f32 %v417, %v1124
        %v1126 = vpop.f32.mrb[0].mxu0
        %1127 = vdwg.mxu0
        %1128 = vmatprep.subr.bf16.mxu0 0
        %1129 = vmatpush1.bf16.msra.mxu0 %v831
        %1130 = vmatprep.subr.bf16.mxu0 0
        %1131 = vmatpush1.bf16.msra.mxu0 %v834
        %1132 = vmatprep.subr.bf16.mxu0 0
        %1133 = vmatpush1.bf16.msra.mxu0 %v837
        %1134 = vmatprep.subr.bf16.mxu0 0
        %1135 = vmatpush1.bf16.msra.mxu0 %v840
        %1136 = vmatprep.subr.bf16.mxu0 0
        %1137 = vmatpush1.bf16.msra.mxu0 %v843
        %1138 = vmatprep.subr.bf16.mxu0 0
        %1139 = vmatpush1.bf16.msra.mxu0 %v846
        %1140 = vmatprep.subr.bf16.mxu0 0
        %1141 = vmatpush1.bf16.msra.mxu0 %v849
        %1142 = vmatprep.subr.bf16.mxu0 0
        %1143 = vmatpush1.bf16.msra.mxu0 %v852
        %1144 = vmatprep.subr.bf16.mxu0 0
        %1145 = vmatpush1.bf16.msra.mxu0 %v855
        %1146 = vmatprep.subr.bf16.mxu0 0
        %1147 = vmatpush1.bf16.msra.mxu0 %v858
        %1148 = vmatprep.subr.bf16.mxu0 0
        %1149 = vmatpush1.bf16.msra.mxu0 %v861
        %1150 = vmatprep.subr.bf16.mxu0 0
        %1151 = vmatpush1.bf16.msra.mxu0 %v864
        %1152 = vmatprep.subr.bf16.mxu0 0
        %1153 = vmatpush1.bf16.msra.mxu0 %v867
        %1154 = vmatprep.subr.bf16.mxu0 0
        %1155 = vmatpush1.bf16.msra.mxu0 %v870
        %1156 = vmatprep.subr.bf16.mxu0 0
        %1157 = vmatpush1.bf16.msra.mxu0 %v873
        %1158 = vmatprep.subr.bf16.mxu0 0
        %1159 = vmatpush1.bf16.msra.mxu0 %v876
        %1160 = vmatprep.mubr.bf16.mxu0 %v448
        %1161 = vmatmul.mubr.bf16.gmra.mrb[0].mxu0 %v447
        %v1162 = vpop.f32.mrb[0].mxu0
        %v1163 = vadd.f32 %v1114, %v1162
        %v1164 = vpop.f32.mrb[0].mxu0
        %v1165 = vpop.f32.mrb[0].mxu0
        %v1166 = vadd.f32 %v1117, %v1165
        %v1167 = vpop.f32.mrb[0].mxu0
        %1168 = vmatprep.mubr.bf16.mxu0 %v452
        %1169 = vmatmul.mubr.bf16.gmra.mrb[0].mxu0 %v451
        %v1170 = vpop.f32.mrb[0].mxu0
        %v1171 = vadd.f32 %v1122, %v1170
        %v1172 = vpop.f32.mrb[0].mxu0
        %v1173 = vpop.f32.mrb[0].mxu0
        %v1174 = vadd.f32 %v1125, %v1173
        %v1175 = vpop.f32.mrb[0].mxu0
        %1176 = vdwg.mxu0
        %1177 = vst [vmem:[%s260] sm:$0xff] %v1061
        %1178 = vst [vmem:[%s260 + $0x8] sm:$0xff] %v1063
        %1179 = vst [vmem:[%s260 + $0x10] sm:$0xff] %v1163
        %1180 = vst [vmem:[%s260 + $0x18] sm:$0xff] %v1065
        %1181 = vst [vmem:[%s260 + $0x20] sm:$0xff] %v1067
        %1182 = vst [vmem:[%s260 + $0x28] sm:$0xff] %v1166
        %1183 = vst [vmem:[%s260 + $0x30] sm:$0xff] %v1071
        %1184 = vst [vmem:[%s260 + $0x38] sm:$0xff] %v1073
        %1185 = vst [vmem:[%s260 + $0x40] sm:$0xff] %v1171
        %1186 = vst [vmem:[%s260 + $0x48] sm:$0xff] %v1075
        %1187 = vst [vmem:[%s260 + $0x50] sm:$0xff] %v1077
        %1188 = vst [vmem:[%s260 + $0x58] sm:$0xff] %v1174
        %s1189 = sand.u32 %s125, 1
        %s1190 = scalar_lea.sflag [#allocation4], %s1189
        %s1191 = sand.u32 %s125, 1
        %s1192 = smul.addr %s1191, 96
        %s1193 = scalar_lea.vmem [#allocation7], %s1192
        // Predicated region
        $region41: #{tpu_custom_call.1} parent=31 // pred_check
          %p1194 = pneg %p135
        $region42: #{tpu_custom_call.1} parent=31 // pred_check_branch
          %1196 = sbr.rel (%p1194) target = $region44
        $region43: #{tpu_custom_call.1} parent=31 // pred_region
          %s1197 = smul.u32 4, %s28
          %s1199 = ssub.s32 1536, 1536
          %1200 = vsyncadd %s1190, %s1199
          %s1201 = smul.addr %s1197, 3
          %s1202 = smul.addr %s27, 12
          %s1203 = sadd.s32 %s1201, %s1202
          %s1204 = smul.addr %s1203, 128
          %s1205 = scalar_lea.hbm %s3, %s1204
          %s1206 = sshll.u32 %s1193, 4
          %s1207 = int_to_ptr.vmem [resolvable:$true] %s1206
          %1212 = dma.vmem_to_hbm [thread:$0]  %s1207, 1536, %s1205, %s1190, 384, 384, 24
        $region44: #{tpu_custom_call.1} parent=31 // pred_fallthru
          _
      $region32: #{tpu_custom_call.1} parent=5 // pred_fallthru
        _
      %p1213 = scmp.le.s32.totalorder 2, %s18
      // Predicated region
      $region45: #{tpu_custom_call.1} parent=5 // pred_check
        %p1214 = pneg %p1213
      $region46: #{tpu_custom_call.1} parent=5 // pred_check_branch
        %1216 = sbr.rel (%p1214) target = $region48
      $region47: #{tpu_custom_call.1} parent=5 // pred_region
        %s1217 = ssub.s32 %s18, 2
        // Predicated region
        $region49: #{tpu_custom_call.1} parent=47 // pred_check
          %p1218 = pneg %p141
        $region50: #{tpu_custom_call.1} parent=47 // pred_check_branch
          %1220 = sbr.rel (%p1218) target = $region52
        $region51: #{tpu_custom_call.1} parent=47 // pred_region
          %s1221 = sand.u32 %s126, 1
          %s1222 = scalar_lea.sflag [#allocation4], %s1221
          %s1223 = sand.u32 %s126, 1
          %s1224 = smul.addr %s1223, 96
          %s1225 = scalar_lea.vmem [#allocation7], %s1224
          %1226 = dma.done %s1222, 1536
        $region52: #{tpu_custom_call.1} parent=47 // pred_fallthru
          _
      $region48: #{tpu_custom_call.1} parent=5 // pred_fallthru
        _
    $region6: #{tpu_custom_call.1} parent=1 // loop_footer
      %s22 = sadd.s32 1, %s18
    $region7: #{tpu_custom_call.1} parent=1 // loop_footer_branch
      %17 = sbr.rel target = $region3
    $region8: #{tpu_custom_call.1} parent=1 // loop_exit
      _
    %1227 = vsyncpa [#allocation3], 1
    %s1228 = scalar_lea.sflag [#allocation3], 1
    %1229 = vsyncpa %s1228, 1
    %1230 = vsyncpa [#allocation6], 1
    %s1231 = scalar_lea.sflag [#allocation6], 1
    %1232 = vsyncpa %s1231, 1
    %1233 = vsyncpa [#allocation4], 1
    %s1234 = scalar_lea.sflag [#allocation4], 1
    %1235 = vsyncpa %s1234, 1

</llo_original>
